<compile_context>
chip_gen: v5e
topology: v5e:2x2
jax: 0.10.0
libtpu: 0.0.40
codegen_flags: <defaults>
</compile_context>

<pallas_src>
import jax
import jax.numpy as jnp
from jax.experimental import pallas as pl
from jax.experimental.pallas import tpu as pltpu


def make_fused_gcn_kernel(num_layers, graphs_per_step, nodes_per_graph):
    """Fused forward: all GCN layers + ReLU + per-graph node-1 selection."""

    def kernel(adj_ref, x_ref, *rest):
        # adj_ref : (1, GN, GN)  f32  block-diagonal normalized adjacency
        # x_ref   : (1, GN, Cin) f32  stacked node features of the group
        # rest    : w0, b0, w1, b1, ..., o_ref
        #   w_l   : (C_l, Cout)  f32  shared layer weight
        #   b_l   : (1, Cout)    f32  shared layer bias
        #   o_ref : (1, G, Cout) f32  relu(last layer)[node 1] per graph
        wb_refs = rest[: 2 * num_layers]
        o_ref = rest[2 * num_layers]

        adj = adj_ref[0]                       # (GN, GN)
        h = x_ref[0]                           # (GN, C); plain traced value —
                                               # no VMEM scratch round-trip.
        for layer in range(num_layers):
            w_ref = wb_refs[2 * layer]
            b_ref = wb_refs[2 * layer + 1]
            # Fat X@W on the MXU: M = G*N rows shared across all graphs.
            xw = jnp.dot(h, w_ref[...], preferred_element_type=jnp.float32)
            # Block-diagonal aggregation (one matmul for the whole group).
            ax = jnp.dot(adj, xw, preferred_element_type=jnp.float32)
            h = jnp.maximum(ax + b_ref[...], 0.0)        # bias + ReLU (VPU)

        # forward() keeps only node index 1 of each graph: slice those rows
        # from the already-computed activations and store them as a single
        # lane-dense (G, Cout) block (one store per step, not per graph).
        rows = [
            h[g * nodes_per_graph + 1 : g * nodes_per_graph + 2, :]
            for g in range(graphs_per_step)
        ]
        o_ref[0] = jnp.concatenate(rows, axis=0)

    return kernel


def gcn_encoder_forward(node_feats, adjs, weights, biases, *, num_steps=2):
    """relu(GCNConv)^L per graph; returns x[:, 1, :] of shape (B, Cout).

    node_feats: (B, N, Cin) f32; adjs: (B, N, N) f32 normalized adjacencies;
    weights[l]: (C_l, Cout);     biases[l]: (Cout,) or (1, Cout).
    num_steps : grid steps; keep >= 2 on v7x so both TensorCores get work.
    """
    B, N, Cin = node_feats.shape
    num_layers = len(weights)
    Cout = weights[0].shape[-1]
    assert N >= 2, "forward() reads node index 1"
    for w in weights[1:]:
        assert w.shape == (Cout, Cout)

    # --- group the batch: num_steps grid steps x G graphs per step ---------
    num_steps = max(1, min(num_steps, B))
    B_pad = ((B + num_steps - 1) // num_steps) * num_steps
    node_feats = jnp.asarray(node_feats, jnp.float32)
    adjs = jnp.asarray(adjs, jnp.float32)
    if B_pad != B:
        pad = B_pad - B
        node_feats = jnp.concatenate(
            [node_feats, jnp.zeros((pad, N, Cin), jnp.float32)], axis=0)
        adjs = jnp.concatenate(
            [adjs, jnp.zeros((pad, N, N), jnp.float32)], axis=0)
    G = B_pad // num_steps
    GN = G * N
    # Sublane-align the stacked node dimension.  Picking G so that GN is a
    # multiple of 128 (as in the demo) also makes the adjacency lane-dense.
    GN_pad = ((GN + 7) // 8) * 8

    # Stack features and pack block-diagonal adjacencies per grid step.
    # Padded rows/cols are zero, so they never contribute to real rows.
    x_steps = jnp.zeros((num_steps, GN_pad, Cin), jnp.float32)
    adj_steps = jnp.zeros((num_steps, GN_pad, GN_pad), jnp.float32)
    for s in range(num_steps):
        for g in range(G):
            b = s * G + g
            x_steps = x_steps.at[s, g * N:(g + 1) * N, :].set(node_feats[b])
            adj_steps = adj_steps.at[s, g * N:(g + 1) * N,
                                     g * N:(g + 1) * N].set(adjs[b])

    ws_f32 = [jnp.asarray(w, jnp.float32) for w in weights]
    bs_f32 = [jnp.asarray(b, jnp.float32).reshape(1, Cout) for b in biases]

    wb_inputs, wb_specs = [], []
    for w, b in zip(ws_f32, bs_f32):
        wb_inputs += [w, b]
        # Grid-invariant (constant index_map).  Tiny at 128x128 f32; for large
        # Cin/Cout add pipeline_mode=pl.Buffered(1) to halve their footprint.
        wb_specs += [
            pl.BlockSpec(w.shape, lambda s: (0, 0)),
            pl.BlockSpec(b.shape, lambda s: (0, 0)),
        ]

    out = pl.pallas_call(
        make_fused_gcn_kernel(num_layers, G, N),
        out_shape=jax.ShapeDtypeStruct((num_steps, G, Cout), jnp.float32),
        grid=(num_steps,),
        in_specs=[
            pl.BlockSpec((1, GN_pad, GN_pad), lambda s: (s, 0, 0)),
            pl.BlockSpec((1, GN_pad, Cin), lambda s: (s, 0, 0)),
            *wb_specs,
        ],
        out_specs=pl.BlockSpec((1, G, Cout), lambda s: (s, 0, 0)),
        compiler_params=pltpu.CompilerParams(
            # One graph-group per step; "parallel" lets v7x split the steps
            # across its two TensorCores (no-op on single-core v5e/v6e).
            dimension_semantics=("parallel",),
        ),
    )(adj_steps, x_steps, *wb_inputs)
    return out.reshape(B_pad, Cout)[:B]


def build_gcn_adj(edge_index, num_nodes):
    """Dense A_hat = D^{-1/2}(A + I)D^{-1/2}, matching PyG GCNConv gcn_norm.

    edge_index: (2, E) int32, row 0 = source, row 1 = target (PyG convention).
    Returns (N, N) f32 with A_hat[target, source] = norm, so out = A_hat @ x.
    """
    row, col = edge_index[0], edge_index[1]
    loops = jnp.arange(num_nodes, dtype=edge_index.dtype)
    row = jnp.concatenate([row, loops])
    col = jnp.concatenate([col, loops])
    ones = jnp.ones(row.shape[0], dtype=jnp.float32)
    deg = jnp.zeros((num_nodes,), jnp.float32).at[col].add(ones)
    dinv = jnp.where(deg > 0.0, jax.lax.rsqrt(deg), 0.0)
    norm = dinv[row] * dinv[col]
    adj = jnp.zeros((num_nodes, num_nodes), jnp.float32).at[col, row].add(norm)
    return adj


def reference_forward(node_feats, adjs, weights, biases):
    """Pure-JAX reference of the per-graph relu(GCNConv)^L + node-1 select."""
    h = node_feats
    for w, b in zip(weights, biases):
        h = jnp.einsum("bnc,cd->bnd", h, w)
        h = jnp.einsum("bnm,bmd->bnd", adjs, h)
        h = jnp.maximum(h + b.reshape(1, 1, -1), 0.0)
    return h[:, 1, :]


if __name__ == "__main__":
    # Small, deterministic synthetic setup.  B*N / num_steps = 128 rows per
    # grid step -> lane-dense block-diagonal adjacency and a full-M matmul.
    B = 16           # batch of graphs
    N = 16           # nodes per graph
    IN_CHANNELS = 128
    OUT_CHANNELS = 128
    NUM_LAYERS = 2

    key = jax.random.PRNGKey(0)
    k_feat, k_w0, k_w1, k_b = jax.random.split(key, 4)

    # Node features stand in for the pooled BERT outputs.
    node_feats = jax.random.normal(k_feat, (B, N, IN_CHANNELS), dtype=jnp.float32)

    # Deterministic edge_index per graph: undirected chain 0-1-...-(N-1) plus
    # one graph-dependent extra edge so the per-graph outputs differ.
    adj_list = []
    for b in range(B):
        src = jnp.arange(N - 1, dtype=jnp.int32)
        dst = src + 1
        extra_s = jnp.array([0], dtype=jnp.int32)
        extra_t = jnp.array([2 + (b % (N - 3))], dtype=jnp.int32)
        edge_index = jnp.stack(
            [
                jnp.concatenate([src, dst, extra_s, extra_t]),
                jnp.concatenate([dst, src, extra_t, extra_s]),
            ],
            axis=0,
        )
        adj_list.append(build_gcn_adj(edge_index, N))
    adjs = jnp.stack(adj_list, axis=0)

    # GCNConv params: layer 0 (Cin -> Cout), layers 1.. (Cout -> Cout).
    def glorot(k, fan_in, fan_out):
        scale = jnp.sqrt(2.0 / (fan_in + fan_out))
        return jax.random.normal(k, (fan_in, fan_out), dtype=jnp.float32) * scale

    weights = [glorot(k_w0, IN_CHANNELS, OUT_CHANNELS)]
    w_keys = jax.random.split(k_w1, max(NUM_LAYERS - 1, 1))
    for i in range(NUM_LAYERS - 1):
        weights.append(glorot(w_keys[i], OUT_CHANNELS, OUT_CHANNELS))
    b_keys = jax.random.split(k_b, NUM_LAYERS)
    biases = [
        0.01 * jax.random.normal(b_keys[i], (OUT_CHANNELS,), dtype=jnp.float32)
        for i in range(NUM_LAYERS)
    ]

    result = gcn_encoder_forward(node_feats, adjs, weights, biases, num_steps=2)
    result = jax.block_until_ready(result)
    assert result.shape == (B, OUT_CHANNELS), result.shape

    ref = reference_forward(node_feats, adjs, weights, biases)
    ref = jax.block_until_ready(ref)
    assert jnp.all(jnp.isfinite(result))
    # Relaxed tolerance: TPU matmul accumulation paths differ slightly from
    # the XLA einsum reference.
    assert jnp.allclose(result, ref, rtol=5e-2, atol=5e-2), (
        float(jnp.max(jnp.abs(result - ref))))
    print("KERNEL_OK")
</pallas_src>

<mosaic_0001>
module attributes {stable_mosaic.version = 11 : i64} {
  func.func @kernel(%arg0: i32, %arg1: memref<1x128x128xf32, #tpu.memory_space<vmem>>, %arg2: memref<1x128x128xf32, #tpu.memory_space<vmem>>, %arg3: memref<128x128xf32, #tpu.memory_space<vmem>>, %arg4: memref<1x128xf32, #tpu.memory_space<vmem>>, %arg5: memref<128x128xf32, #tpu.memory_space<vmem>>, %arg6: memref<1x128xf32, #tpu.memory_space<vmem>>, %arg7: memref<1x8x128xf32, #tpu.memory_space<vmem>>) attributes {dimension_semantics = [#tpu.dimension_semantics<parallel>], iteration_bounds = array<i64: 2>, scalar_prefetch = 0 : i64, scratch_operands = 0 : i64, tpu.core_type = #tpu.core_type<tc>, window_params = [{transform_indices = @transform_0, window_bounds = array<i64: 1, 128, 128>}, {transform_indices = @transform_1, window_bounds = array<i64: 1, 128, 128>}, {pipeline_mode = #tpu.pipeline_mode<synchronous>, transform_indices = @transform_2, window_bounds = array<i64: 128, 128>}, {pipeline_mode = #tpu.pipeline_mode<synchronous>, transform_indices = @transform_3, window_bounds = array<i64: 1, 128>}, {pipeline_mode = #tpu.pipeline_mode<synchronous>, transform_indices = @transform_4, window_bounds = array<i64: 128, 128>}, {pipeline_mode = #tpu.pipeline_mode<synchronous>, transform_indices = @transform_5, window_bounds = array<i64: 1, 128>}, {transform_indices = @transform_6, window_bounds = array<i64: 1, 8, 128>}]} {
    %c0 = arith.constant 0 : index
    %c0_0 = arith.constant 0 : index
    %c0_1 = arith.constant 0 : index
    %0 = vector.load %arg1[%c0, %c0_0, %c0_1] : memref<1x128x128xf32, #tpu.memory_space<vmem>>, vector<1x128x128xf32>
    %1 = vector.shape_cast %0 : vector<1x128x128xf32> to vector<128x128xf32>
    %c0_2 = arith.constant 0 : index
    %c0_3 = arith.constant 0 : index
    %c0_4 = arith.constant 0 : index
    %2 = vector.load %arg2[%c0_2, %c0_3, %c0_4] : memref<1x128x128xf32, #tpu.memory_space<vmem>>, vector<1x128x128xf32>
    %3 = vector.shape_cast %2 : vector<1x128x128xf32> to vector<128x128xf32>
    %c0_5 = arith.constant 0 : index
    %c0_6 = arith.constant 0 : index
    %4 = vector.load %arg3[%c0_5, %c0_6] : memref<128x128xf32, #tpu.memory_space<vmem>>, vector<128x128xf32>
    %cst = arith.constant dense<0.000000e+00> : vector<128x128xf32>
    %5 = tpu.matmul %3, %4, %cst {dimension_numbers = #tpu.dot_dimension_numbers<[1], [0], [0], [1], [0, 0, 1, 1], [], []>} : vector<128x128xf32>, vector<128x128xf32>, vector<128x128xf32> -> vector<128x128xf32>
    %cst_7 = arith.constant dense<0.000000e+00> : vector<128x128xf32>
    %6 = tpu.matmul %1, %5, %cst_7 {dimension_numbers = #tpu.dot_dimension_numbers<[1], [0], [0], [1], [0, 0, 1, 1], [], []>} : vector<128x128xf32>, vector<128x128xf32>, vector<128x128xf32> -> vector<128x128xf32>
    %c0_8 = arith.constant 0 : index
    %c0_9 = arith.constant 0 : index
    %7 = vector.load %arg4[%c0_8, %c0_9] : memref<1x128xf32, #tpu.memory_space<vmem>>, vector<1x128xf32>
    %8 = vector.broadcast %7 : vector<1x128xf32> to vector<128x128xf32>
    %9 = arith.addf %6, %8 : vector<128x128xf32>
    %cst_10 = arith.constant 0.000000e+00 : f32
    %10 = vector.broadcast %cst_10 : f32 to vector<128x128xf32>
    %11 = arith.maximumf %9, %10 : vector<128x128xf32>
    %c0_11 = arith.constant 0 : index
    %c0_12 = arith.constant 0 : index
    %12 = vector.load %arg5[%c0_11, %c0_12] : memref<128x128xf32, #tpu.memory_space<vmem>>, vector<128x128xf32>
    %cst_13 = arith.constant dense<0.000000e+00> : vector<128x128xf32>
    %13 = tpu.matmul %11, %12, %cst_13 {dimension_numbers = #tpu.dot_dimension_numbers<[1], [0], [0], [1], [0, 0, 1, 1], [], []>} : vector<128x128xf32>, vector<128x128xf32>, vector<128x128xf32> -> vector<128x128xf32>
    %cst_14 = arith.constant dense<0.000000e+00> : vector<128x128xf32>
    %14 = tpu.matmul %1, %13, %cst_14 {dimension_numbers = #tpu.dot_dimension_numbers<[1], [0], [0], [1], [0, 0, 1, 1], [], []>} : vector<128x128xf32>, vector<128x128xf32>, vector<128x128xf32> -> vector<128x128xf32>
    %c0_15 = arith.constant 0 : index
    %c0_16 = arith.constant 0 : index
    %15 = vector.load %arg6[%c0_15, %c0_16] : memref<1x128xf32, #tpu.memory_space<vmem>>, vector<1x128xf32>
    %16 = vector.broadcast %15 : vector<1x128xf32> to vector<128x128xf32>
    %17 = arith.addf %14, %16 : vector<128x128xf32>
    %cst_17 = arith.constant 0.000000e+00 : f32
    %18 = vector.broadcast %cst_17 : f32 to vector<128x128xf32>
    %19 = arith.maximumf %17, %18 : vector<128x128xf32>
    %20 = vector.extract_strided_slice %19 {offsets = [1, 0], sizes = [1, 128], strides = [1, 1]} : vector<128x128xf32> to vector<1x128xf32>
    %21 = vector.extract_strided_slice %19 {offsets = [17, 0], sizes = [1, 128], strides = [1, 1]} : vector<128x128xf32> to vector<1x128xf32>
    %22 = vector.extract_strided_slice %19 {offsets = [33, 0], sizes = [1, 128], strides = [1, 1]} : vector<128x128xf32> to vector<1x128xf32>
    %23 = vector.extract_strided_slice %19 {offsets = [49, 0], sizes = [1, 128], strides = [1, 1]} : vector<128x128xf32> to vector<1x128xf32>
    %24 = vector.extract_strided_slice %19 {offsets = [65, 0], sizes = [1, 128], strides = [1, 1]} : vector<128x128xf32> to vector<1x128xf32>
    %25 = vector.extract_strided_slice %19 {offsets = [81, 0], sizes = [1, 128], strides = [1, 1]} : vector<128x128xf32> to vector<1x128xf32>
    %26 = vector.extract_strided_slice %19 {offsets = [97, 0], sizes = [1, 128], strides = [1, 1]} : vector<128x128xf32> to vector<1x128xf32>
    %27 = vector.extract_strided_slice %19 {offsets = [113, 0], sizes = [1, 128], strides = [1, 1]} : vector<128x128xf32> to vector<1x128xf32>
    %28 = tpu.concatenate %20, %21, %22, %23, %24, %25, %26, %27 in 0 : vector<1x128xf32>, vector<1x128xf32>, vector<1x128xf32>, vector<1x128xf32>, vector<1x128xf32>, vector<1x128xf32>, vector<1x128xf32>, vector<1x128xf32> -> vector<8x128xf32>
    %c0_18 = arith.constant 0 : index
    %c0_19 = arith.constant 0 : index
    %c0_20 = arith.constant 0 : index
    %29 = vector.load %arg7[%c0_18, %c0_19, %c0_20] : memref<1x8x128xf32, #tpu.memory_space<vmem>>, vector<1x8x128xf32>
    %30 = vector.shape_cast %29 : vector<1x8x128xf32> to vector<8x128xf32>
    %31 = vector.shape_cast %28 : vector<8x128xf32> to vector<1x8x128xf32>
    tpu.vector_store %arg7[%c0_18, %c0_19, %c0_20], %31 {strides = array<i32>} : memref<1x8x128xf32, #tpu.memory_space<vmem>>, vector<1x8x128xf32>,
    return
  }
  func.func @transform_0(%arg0: i32) -> (i32, i32, i32) {
    %c0_i32 = arith.constant 0 : i32
    %c0_i32_0 = arith.constant 0 : i32
    %c0_i32_1 = arith.constant 0 : i32
    return %arg0, %c0_i32, %c0_i32_0 : i32, i32, i32
  }
  func.func @transform_1(%arg0: i32) -> (i32, i32, i32) {
    %c0_i32 = arith.constant 0 : i32
    %c0_i32_0 = arith.constant 0 : i32
    %c0_i32_1 = arith.constant 0 : i32
    return %arg0, %c0_i32, %c0_i32_0 : i32, i32, i32
  }
  func.func @transform_2(%arg0: i32) -> (i32, i32) {
    %c0_i32 = arith.constant 0 : i32
    %c0_i32_0 = arith.constant 0 : i32
    %c0_i32_1 = arith.constant 0 : i32
    return %c0_i32, %c0_i32_0 : i32, i32
  }
  func.func @transform_3(%arg0: i32) -> (i32, i32) {
    %c0_i32 = arith.constant 0 : i32
    %c0_i32_0 = arith.constant 0 : i32
    %c0_i32_1 = arith.constant 0 : i32
    return %c0_i32, %c0_i32_0 : i32, i32
  }
  func.func @transform_4(%arg0: i32) -> (i32, i32) {
    %c0_i32 = arith.constant 0 : i32
    %c0_i32_0 = arith.constant 0 : i32
    %c0_i32_1 = arith.constant 0 : i32
    return %c0_i32, %c0_i32_0 : i32, i32
  }
  func.func @transform_5(%arg0: i32) -> (i32, i32) {
    %c0_i32 = arith.constant 0 : i32
    %c0_i32_0 = arith.constant 0 : i32
    %c0_i32_1 = arith.constant 0 : i32
    return %c0_i32, %c0_i32_0 : i32, i32
  }
  func.func @transform_6(%arg0: i32) -> (i32, i32, i32) {
    %c0_i32 = arith.constant 0 : i32
    %c0_i32_0 = arith.constant 0 : i32
    %c0_i32_1 = arith.constant 0 : i32
    return %arg0, %c0_i32, %c0_i32_0 : i32, i32, i32
  }
}

</mosaic_0001>

<llo_original>
// kernel: tpu_custom_call.1
$region0: #{tpu_custom_call.1}
  #allocation0 [shape = 'u32[]', space=smem, size = 0x4, offset = 0x4, fixed_abs, tag = 'smem constant byte address 0x4 - core index']
  #allocation1 [shape = 'u32[72,128]{1,0:T(1,128)}', space=vmem, size = 0x9000, scoped, tag = 'internal scratch']
  %s0 = inlined_call_operand.hbm [shape: f32[2,128,128], index: 0, kind: input, shape index: {}]
  %s1 = inlined_call_operand.hbm [shape: f32[2,128,128], index: 1, kind: input, shape index: {}]
  %s2 = inlined_call_operand.hbm [shape: f32[128,128], index: 2, kind: input, shape index: {}]
  %s3 = inlined_call_operand.vmem [shape: f32[1,128], index: 3, kind: input, shape index: {}]
  %s4 = inlined_call_operand.hbm [shape: f32[128,128], index: 4, kind: input, shape index: {}]
  %s5 = inlined_call_operand.vmem [shape: f32[1,128], index: 5, kind: input, shape index: {}]
  %s6 = inlined_call_operand.hbm [shape: f32[2,8,128], index: 6, kind: output, shape index: {}]
  %s7 = sld [smem:[#allocation0]]
  $region73: #{tpu_custom_call.1} parent=0
    _
  %s9 = ssub.s32 1, %s7
  %s10 = scalar_select 0, %s9, %s7
  $region1: #{tpu_custom_call.1} parent=0
    #allocation2 [shape = 'u8[131072]{0}', space=vmem, size = 0x20000, scoped, tag = 'input window, operand 0']
    #allocation3 [shape = 's32[2]{0}', space=sflag, size = 0x8, scoped, tag = 'scoped memory for tpu_custom_call.1']
    #allocation4 [shape = 's32[2]{0}', space=sflag, size = 0x8, scoped, tag = 'scoped memory for tpu_custom_call.1']
    #allocation5 [shape = 'u8[131072]{0}', space=vmem, size = 0x20000, scoped, tag = 'input window, operand 1']
    #allocation6 [shape = 's32[2]{0}', space=sflag, size = 0x8, scoped, tag = 'scoped memory for tpu_custom_call.1']
    #allocation7 [shape = 'u8[65536]{0}', space=vmem, size = 0x10000, scoped, tag = 'input window, operand 2, single buffered']
    #allocation8 [shape = 'u8[65536]{0}', space=vmem, size = 0x10000, scoped, tag = 'input window, operand 4, single buffered']
    #allocation9 [shape = 's32[1]{0}', space=sflag, size = 0x4, scoped, tag = 'scoped memory for tpu_custom_call.1']
    #allocation10 [shape = 'u8[8192]{0}', space=vmem, size = 0x2000, scoped, tag = 'output window, operand 0']
    %11 = vsyncpa [#allocation3], 0
    %s12 = scalar_lea.sflag [#allocation3], 1
    %13 = vsyncpa %s12, 0
    %14 = vsyncpa [#allocation6], 0
    %s15 = scalar_lea.sflag [#allocation6], 1
    %16 = vsyncpa %s15, 0
    %17 = vsyncpa [#allocation9], 0
    %18 = vsyncpa [#allocation4], 0
    %s19 = scalar_lea.sflag [#allocation4], 1
    %20 = vsyncpa %s19, 0
    loop: start=0, step=1, limit=4
    $region2: #{tpu_custom_call.1} parent=1 // loop_pre_header
      _
    $region3: #{tpu_custom_call.1} parent=1 // loop_header
      %s22 = sphi 0, %s26
      %p23 = scmp.ge.s32.totalorder %s22, 4
      %s32 = sphi 0, %s34
      %s35 = sphi 0, %s32
      %s36 = sphi 0, %s35
      %s52 = sphi 0, %s36
      %s58 = sphi 0, %s60
      %s61 = sphi 0, %s58
      %s62 = sphi 0, %s61
      %s78 = sphi 0, %s62
      %s82 = sphi 0, %s82
      %s84 = sphi 0, %s82
      %s85 = sphi 0, %s84
      %s99 = sphi 0, %s85
      %s103 = sphi 0, %s103
      %s105 = sphi 0, %s103
      %s106 = sphi 0, %s105
      %s120 = sphi 0, %s106
      %s124 = sphi 0, %s124
      %s126 = sphi 0, %s124
      %s127 = sphi 0, %s126
      %s141 = sphi 0, %s127
      %s145 = sphi 0, %s145
      %s147 = sphi 0, %s145
      %s148 = sphi 0, %s147
      %s162 = sphi 0, %s148
      %s168 = sphi 0, %s170
      %s171 = sphi 0, %s168
      %s172 = sphi 0, %s171
      %s188 = sphi 0, %s172
    $region4: #{tpu_custom_call.1} parent=1 // loop_header_branch
      %25 = sbr.rel (%p23) target = $region8
    $region5: #{tpu_custom_call.1} parent=1 // loop_body
      %s27 = ssub.s32 %s22, 1
      %s28 = ssub.s32 %s22, 2
      %s29 = sadd.s32 %s22, 1
      %s30 = ssub.s32 %s22, %s29
      %p31 = scmp.eq.s32.totalorder %s30, 0
      %s33 = sadd.s32 %s32, 1
      %s34 = scalar_select %p31, %s32, %s33
      %p37 = pneg %p31
      %p38 = scmp.eq.s32.totalorder %s22, 1
      %p39 = por %p37, %p38
      %p40 = scmp.ne.s32.totalorder %s32, %s35
      %p41 = scmp.eq.s32.totalorder %s22, 0
      %p42 = por %p40, %p41
      %p43 = scmp.ne.s32.totalorder %s32, %s35
      %p44 = scmp.eq.s32.totalorder %s27, 1
      %p45 = por %p43, %p44
      %p46 = scmp.ne.s32.totalorder %s35, %s36
      %p47 = scmp.eq.s32.totalorder %s27, 0
      %p48 = por %p46, %p47
      %p49 = scmp.ne.s32.totalorder %s35, %s36
      %p50 = scmp.eq.s32.totalorder %s28, 1
      %p51 = por %p49, %p50
      %p53 = scmp.ne.s32.totalorder %s36, %s52
      %p54 = scmp.eq.s32.totalorder %s28, 0
      %p55 = por %p53, %p54
      %s56 = ssub.s32 %s22, %s29
      %p57 = scmp.eq.s32.totalorder %s56, 0
      %s59 = sadd.s32 %s58, 1
      %s60 = scalar_select %p57, %s58, %s59
      %p63 = pneg %p57
      %p64 = scmp.eq.s32.totalorder %s22, 1
      %p65 = por %p63, %p64
      %p66 = scmp.ne.s32.totalorder %s58, %s61
      %p67 = scmp.eq.s32.totalorder %s22, 0
      %p68 = por %p66, %p67
      %p69 = scmp.ne.s32.totalorder %s58, %s61
      %p70 = scmp.eq.s32.totalorder %s27, 1
      %p71 = por %p69, %p70
      %p72 = scmp.ne.s32.totalorder %s61, %s62
      %p73 = scmp.eq.s32.totalorder %s27, 0
      %p74 = por %p72, %p73
      %p75 = scmp.ne.s32.totalorder %s61, %s62
      %p76 = scmp.eq.s32.totalorder %s28, 1
      %p77 = por %p75, %p76
      %p79 = scmp.ne.s32.totalorder %s62, %s78
      %p80 = scmp.eq.s32.totalorder %s28, 0
      %p81 = por %p79, %p80
      %s83 = sadd.s32 %s82, 1
      %p86 = scmp.eq.s32.totalorder %s22, 1
      %p87 = scmp.ne.s32.totalorder %s82, %s84
      %p88 = scmp.eq.s32.totalorder %s22, 0
      %p89 = por %p87, %p88
      %p90 = scmp.ne.s32.totalorder %s82, %s84
      %p91 = scmp.eq.s32.totalorder %s27, 1
      %p92 = por %p90, %p91
      %p93 = scmp.ne.s32.totalorder %s84, %s85
      %p94 = scmp.eq.s32.totalorder %s27, 0
      %p95 = por %p93, %p94
      %p96 = scmp.ne.s32.totalorder %s84, %s85
      %p97 = scmp.eq.s32.totalorder %s28, 1
      %p98 = por %p96, %p97
      %p100 = scmp.ne.s32.totalorder %s85, %s99
      %p101 = scmp.eq.s32.totalorder %s28, 0
      %p102 = por %p100, %p101
      %s104 = sadd.s32 %s103, 1
      %p107 = scmp.eq.s32.totalorder %s22, 1
      %p108 = scmp.ne.s32.totalorder %s103, %s105
      %p109 = scmp.eq.s32.totalorder %s22, 0
      %p110 = por %p108, %p109
      %p111 = scmp.ne.s32.totalorder %s103, %s105
      %p112 = scmp.eq.s32.totalorder %s27, 1
      %p113 = por %p111, %p112
      %p114 = scmp.ne.s32.totalorder %s105, %s106
      %p115 = scmp.eq.s32.totalorder %s27, 0
      %p116 = por %p114, %p115
      %p117 = scmp.ne.s32.totalorder %s105, %s106
      %p118 = scmp.eq.s32.totalorder %s28, 1
      %p119 = por %p117, %p118
      %p121 = scmp.ne.s32.totalorder %s106, %s120
      %p122 = scmp.eq.s32.totalorder %s28, 0
      %p123 = por %p121, %p122
      %s125 = sadd.s32 %s124, 1
      %p128 = scmp.eq.s32.totalorder %s22, 1
      %p129 = scmp.ne.s32.totalorder %s124, %s126
      %p130 = scmp.eq.s32.totalorder %s22, 0
      %p131 = por %p129, %p130
      %p132 = scmp.ne.s32.totalorder %s124, %s126
      %p133 = scmp.eq.s32.totalorder %s27, 1
      %p134 = por %p132, %p133
      %p135 = scmp.ne.s32.totalorder %s126, %s127
      %p136 = scmp.eq.s32.totalorder %s27, 0
      %p137 = por %p135, %p136
      %p138 = scmp.ne.s32.totalorder %s126, %s127
      %p139 = scmp.eq.s32.totalorder %s28, 1
      %p140 = por %p138, %p139
      %p142 = scmp.ne.s32.totalorder %s127, %s141
      %p143 = scmp.eq.s32.totalorder %s28, 0
      %p144 = por %p142, %p143
      %s146 = sadd.s32 %s145, 1
      %p149 = scmp.eq.s32.totalorder %s22, 1
      %p150 = scmp.ne.s32.totalorder %s145, %s147
      %p151 = scmp.eq.s32.totalorder %s22, 0
      %p152 = por %p150, %p151
      %p153 = scmp.ne.s32.totalorder %s145, %s147
      %p154 = scmp.eq.s32.totalorder %s27, 1
      %p155 = por %p153, %p154
      %p156 = scmp.ne.s32.totalorder %s147, %s148
      %p157 = scmp.eq.s32.totalorder %s27, 0
      %p158 = por %p156, %p157
      %p159 = scmp.ne.s32.totalorder %s147, %s148
      %p160 = scmp.eq.s32.totalorder %s28, 1
      %p161 = por %p159, %p160
      %p163 = scmp.ne.s32.totalorder %s148, %s162
      %p164 = scmp.eq.s32.totalorder %s28, 0
      %p165 = por %p163, %p164
      %s166 = ssub.s32 %s22, %s29
      %p167 = scmp.eq.s32.totalorder %s166, 0
      %s169 = sadd.s32 %s168, 1
      %s170 = scalar_select %p167, %s168, %s169
      %p173 = pneg %p167
      %p174 = scmp.eq.s32.totalorder %s22, 1
      %p175 = por %p173, %p174
      %p176 = scmp.ne.s32.totalorder %s168, %s171
      %p177 = scmp.eq.s32.totalorder %s22, 0
      %p178 = por %p176, %p177
      %p179 = scmp.ne.s32.totalorder %s168, %s171
      %p180 = scmp.eq.s32.totalorder %s27, 1
      %p181 = por %p179, %p180
      %p182 = scmp.ne.s32.totalorder %s171, %s172
      %p183 = scmp.eq.s32.totalorder %s27, 0
      %p184 = por %p182, %p183
      %p185 = scmp.ne.s32.totalorder %s171, %s172
      %p186 = scmp.eq.s32.totalorder %s28, 1
      %p187 = por %p185, %p186
      %p189 = scmp.ne.s32.totalorder %s172, %s188
      %p190 = scmp.eq.s32.totalorder %s28, 0
      %p191 = por %p189, %p190
      %p192 = scmp.le.s32.totalorder 1, %s22
      %p193 = scmp.lt.s32.totalorder %s22, 3
      %p194 = pnand %p192, %p193
      %p195 = pneg %p194
      // Predicated region
      $region9: #{tpu_custom_call.1} parent=5 // pred_check
        _
      $region10: #{tpu_custom_call.1} parent=5 // pred_check_branch
        %197 = sbr.rel (%p194) target = $region12
      $region11: #{tpu_custom_call.1} parent=5 // pred_region
        %s198 = ssub.s32 %s22, 1
        // Predicated region
        $region13: #{tpu_custom_call.1} parent=11 // pred_check
          %p199 = pneg %p95
        $region14: #{tpu_custom_call.1} parent=11 // pred_check_branch
          %201 = sbr.rel (%p199) target = $region16
        $region15: #{tpu_custom_call.1} parent=11 // pred_region
          %203 = vsyncadd [#allocation6], 0
          %s204 = sshll.u32 %s2, 4
          %s205 = int_to_ptr.hbm [resolvable:$true] %s204
          %s206 = sshll.u32 [#allocation7], 4
          %s207 = int_to_ptr.vmem [resolvable:$true] %s206
          %212 = dma.hbm_to_vmem [thread:$0]  %s205, 2048, %s207, [#allocation6], 128, 128, 8
        $region16: #{tpu_custom_call.1} parent=11 // pred_fallthru
          _
        // Predicated region
        $region17: #{tpu_custom_call.1} parent=11 // pred_check
          %p213 = pneg %p116
        $region18: #{tpu_custom_call.1} parent=11 // pred_check_branch
          %215 = sbr.rel (%p213) target = $region20
        $region19: #{tpu_custom_call.1} parent=11 // pred_region
          _
        $region20: #{tpu_custom_call.1} parent=11 // pred_fallthru
          _
        // Predicated region
        $region21: #{tpu_custom_call.1} parent=11 // pred_check
          %p216 = pneg %p137
        $region22: #{tpu_custom_call.1} parent=11 // pred_check_branch
          %218 = sbr.rel (%p216) target = $region24
        $region23: #{tpu_custom_call.1} parent=11 // pred_region
          %220 = vsyncadd [#allocation9], 0
          %s221 = sshll.u32 %s4, 4
          %s222 = int_to_ptr.hbm [resolvable:$true] %s221
          %s223 = sshll.u32 [#allocation8], 4
          %s224 = int_to_ptr.vmem [resolvable:$true] %s223
          %229 = dma.hbm_to_vmem [thread:$0]  %s222, 2048, %s224, [#allocation9], 128, 128, 8
        $region24: #{tpu_custom_call.1} parent=11 // pred_fallthru
          _
        // Predicated region
        $region25: #{tpu_custom_call.1} parent=11 // pred_check
          %p230 = pneg %p158
        $region26: #{tpu_custom_call.1} parent=11 // pred_check_branch
          %232 = sbr.rel (%p230) target = $region28
        $region27: #{tpu_custom_call.1} parent=11 // pred_region
          _
        $region28: #{tpu_custom_call.1} parent=11 // pred_fallthru
          _
      $region12: #{tpu_custom_call.1} parent=5 // pred_fallthru
        _
      %p233 = scmp.lt.s32.totalorder %s22, 2
      // Predicated region
      $region29: #{tpu_custom_call.1} parent=5 // pred_check
        %p234 = pneg %p233
      $region30: #{tpu_custom_call.1} parent=5 // pred_check_branch
        %236 = sbr.rel (%p234) target = $region32
      $region31: #{tpu_custom_call.1} parent=5 // pred_region
        // Predicated region
        $region33: #{tpu_custom_call.1} parent=31 // pred_check
          %p237 = pneg %p42
        $region34: #{tpu_custom_call.1} parent=31 // pred_check_branch
          %239 = sbr.rel (%p237) target = $region36
        $region35: #{tpu_custom_call.1} parent=31 // pred_region
          %s240 = sand.u32 %s32, 1
          %s241 = scalar_lea.sflag [#allocation3], %s240
          %s242 = sand.u32 %s32, 1
          %s243 = smul.addr %s242, 128
          %s244 = scalar_lea.vmem [#allocation2], %s243
          %246 = vsyncadd %s241, 0
          %s247 = smul.addr %s22, 16
          %s248 = smul.addr %s247, 8
          %s249 = scalar_lea.hbm %s0, %s248
          %s250 = sshll.u32 %s249, 4
          %s251 = int_to_ptr.hbm [resolvable:$true] %s250
          %s252 = sshll.u32 %s244, 4
          %s253 = int_to_ptr.vmem [resolvable:$true] %s252
          %258 = dma.hbm_to_vmem [thread:$0]  %s251, 2048, %s253, %s241, 128, 128, 8
        $region36: #{tpu_custom_call.1} parent=31 // pred_fallthru
          _
        // Predicated region
        $region37: #{tpu_custom_call.1} parent=31 // pred_check
          %p259 = pneg %p68
        $region38: #{tpu_custom_call.1} parent=31 // pred_check_branch
          %261 = sbr.rel (%p259) target = $region40
        $region39: #{tpu_custom_call.1} parent=31 // pred_region
          %s262 = sand.u32 %s22, 1
          %s263 = scalar_lea.sflag [#allocation6], %s262
          %s264 = sand.u32 %s58, 1
          %s265 = smul.addr %s264, 128
          %s266 = scalar_lea.vmem [#allocation5], %s265
          %268 = vsyncadd %s263, 0
          %s269 = smul.addr %s22, 16
          %s270 = smul.addr %s269, 8
          %s271 = scalar_lea.hbm %s1, %s270
          %s272 = sshll.u32 %s271, 4
          %s273 = int_to_ptr.hbm [resolvable:$true] %s272
          %s274 = sshll.u32 %s266, 4
          %s275 = int_to_ptr.vmem [resolvable:$true] %s274
          %280 = dma.hbm_to_vmem [thread:$0]  %s273, 2048, %s275, %s263, 128, 128, 8
        $region40: #{tpu_custom_call.1} parent=31 // pred_fallthru
          _
      $region32: #{tpu_custom_call.1} parent=5 // pred_fallthru
        _
      %p281 = scmp.le.s32.totalorder 1, %s22
      %p282 = scmp.lt.s32.totalorder %s22, 3
      %p283 = pnand %p281, %p282
      %p284 = pneg %p283
      // Predicated region
      $region41: #{tpu_custom_call.1} parent=5 // pred_check
        _
      $region42: #{tpu_custom_call.1} parent=5 // pred_check_branch
        %286 = sbr.rel (%p283) target = $region44
      $region43: #{tpu_custom_call.1} parent=5 // pred_region
        %s287 = ssub.s32 %s22, 1
        %s288 = sand.u32 %s35, 1
        %s289 = scalar_lea.sflag [#allocation3], %s288
        %s290 = sand.u32 %s35, 1
        %s291 = smul.addr %s290, 128
        %s292 = scalar_lea.vmem [#allocation2], %s291
        // Predicated region
        $region45: #{tpu_custom_call.1} parent=43 // pred_check
          %p293 = pneg %p48
        $region46: #{tpu_custom_call.1} parent=43 // pred_check_branch
          %295 = sbr.rel (%p293) target = $region48
        $region47: #{tpu_custom_call.1} parent=43 // pred_region
          %297 = dma.done %s289, 2048
        $region48: #{tpu_custom_call.1} parent=43 // pred_fallthru
          _
        %s298 = sand.u32 %s27, 1
        %s299 = scalar_lea.sflag [#allocation6], %s298
        %s300 = sand.u32 %s61, 1
        %s301 = smul.addr %s300, 128
        %s302 = scalar_lea.vmem [#allocation5], %s301
        // Predicated region
        $region49: #{tpu_custom_call.1} parent=43 // pred_check
          %p303 = pneg %p74
        $region50: #{tpu_custom_call.1} parent=43 // pred_check_branch
          %305 = sbr.rel (%p303) target = $region52
        $region51: #{tpu_custom_call.1} parent=43 // pred_region
          %307 = dma.done %s299, 2048
        $region52: #{tpu_custom_call.1} parent=43 // pred_fallthru
          _
        // Predicated region
        $region53: #{tpu_custom_call.1} parent=43 // pred_check
          %p308 = pneg %p95
        $region54: #{tpu_custom_call.1} parent=43 // pred_check_branch
          %310 = sbr.rel (%p308) target = $region56
        $region55: #{tpu_custom_call.1} parent=43 // pred_region
          %312 = dma.done [#allocation6], 2048
        $region56: #{tpu_custom_call.1} parent=43 // pred_fallthru
          _
        // Predicated region
        $region57: #{tpu_custom_call.1} parent=43 // pred_check
          %p313 = pneg %p137
        $region58: #{tpu_custom_call.1} parent=43 // pred_check_branch
          %315 = sbr.rel (%p313) target = $region60
        $region59: #{tpu_custom_call.1} parent=43 // pred_region
          %317 = dma.done [#allocation9], 2048
        $region60: #{tpu_custom_call.1} parent=43 // pred_fallthru
          _
        %s318 = sand.u32 %s35, 1
        %s319 = scalar_lea.sflag [#allocation3], %s318
        %s320 = sand.u32 %s35, 1
        %s321 = smul.addr %s320, 128
        %s322 = scalar_lea.vmem [#allocation2], %s321
        %p323 = pneg %p48
        %p324 = pneg %p45
        %s325 = sand.u32 %s27, 1
        %s326 = scalar_lea.sflag [#allocation6], %s325
        %s327 = sand.u32 %s61, 1
        %s328 = smul.addr %s327, 128
        %s329 = scalar_lea.vmem [#allocation5], %s328
        %p330 = pneg %p74
        %p331 = pneg %p71
        %p332 = pneg %p95
        %p333 = pneg %p92
        %p334 = pneg %p116
        %p335 = pneg %p113
        %p336 = pneg %p137
        %p337 = pneg %p134
        %p338 = pneg %p158
        %p339 = pneg %p155
        %p340 = pneg %p184
        %p341 = pneg %p181
        %s342 = sand.u32 %s171, 1
        %s343 = scalar_lea.sflag [#allocation4], %s342
        %s344 = sand.u32 %s171, 1
        %s345 = smul.addr %s344, 8
        %s346 = scalar_lea.vmem [#allocation10], %s345
        %v347 = vld [vmem:[%s292] sm:$0xff]
        %v348 = vld [vmem:[%s292 + $0x8] sm:$0xff]
        %v349 = vld [vmem:[%s292 + $0x10] sm:$0xff]
        %v350 = vld [vmem:[%s292 + $0x18] sm:$0xff]
        %v351 = vld [vmem:[%s292 + $0x20] sm:$0xff]
        %v352 = vld [vmem:[%s292 + $0x28] sm:$0xff]
        %v353 = vld [vmem:[%s292 + $0x30] sm:$0xff]
        %v354 = vld [vmem:[%s292 + $0x38] sm:$0xff]
        %v355 = vld [vmem:[%s292 + $0x40] sm:$0xff]
        %v356 = vld [vmem:[%s292 + $0x48] sm:$0xff]
        %v357 = vld [vmem:[%s292 + $0x50] sm:$0xff]
        %v358 = vld [vmem:[%s292 + $0x58] sm:$0xff]
        %v359 = vld [vmem:[%s292 + $0x60] sm:$0xff]
        %v360 = vld [vmem:[%s292 + $0x68] sm:$0xff]
        %v361 = vld [vmem:[%s292 + $0x70] sm:$0xff]
        %v362 = vld [vmem:[%s292 + $0x78] sm:$0xff]
        %v363 = vld [vmem:[%s302] sm:$0xff]
        %v364 = vld [vmem:[%s302 + $0x8] sm:$0xff]
        %v365 = vld [vmem:[%s302 + $0x10] sm:$0xff]
        %v366 = vld [vmem:[%s302 + $0x18] sm:$0xff]
        %v367 = vld [vmem:[%s302 + $0x20] sm:$0xff]
        %v368 = vld [vmem:[%s302 + $0x28] sm:$0xff]
        %v369 = vld [vmem:[%s302 + $0x30] sm:$0xff]
        %v370 = vld [vmem:[%s302 + $0x38] sm:$0xff]
        %v371 = vld [vmem:[%s302 + $0x40] sm:$0xff]
        %v372 = vld [vmem:[%s302 + $0x48] sm:$0xff]
        %v373 = vld [vmem:[%s302 + $0x50] sm:$0xff]
        %v374 = vld [vmem:[%s302 + $0x58] sm:$0xff]
        %v375 = vld [vmem:[%s302 + $0x60] sm:$0xff]
        %v376 = vld [vmem:[%s302 + $0x68] sm:$0xff]
        %v377 = vld [vmem:[%s302 + $0x70] sm:$0xff]
        %v378 = vld [vmem:[%s302 + $0x78] sm:$0xff]
        %v379 = vld [vmem:[#allocation7] sm:$0xff]
        %v380 = vld [vmem:[#allocation7 + $0x8] sm:$0xff]
        %v381 = vld [vmem:[#allocation7 + $0x10] sm:$0xff]
        %v382 = vld [vmem:[#allocation7 + $0x18] sm:$0xff]
        %v383 = vld [vmem:[#allocation7 + $0x20] sm:$0xff]
        %v384 = vld [vmem:[#allocation7 + $0x28] sm:$0xff]
        %v385 = vld [vmem:[#allocation7 + $0x30] sm:$0xff]
        %v386 = vld [vmem:[#allocation7 + $0x38] sm:$0xff]
        %v387 = vld [vmem:[#allocation7 + $0x40] sm:$0xff]
        %v388 = vld [vmem:[#allocation7 + $0x48] sm:$0xff]
        %v389 = vld [vmem:[#allocation7 + $0x50] sm:$0xff]
        %v390 = vld [vmem:[#allocation7 + $0x58] sm:$0xff]
        %v391 = vld [vmem:[#allocation7 + $0x60] sm:$0xff]
        %v392 = vld [vmem:[#allocation7 + $0x68] sm:$0xff]
        %v393 = vld [vmem:[#allocation7 + $0x70] sm:$0xff]
        %v394 = vld [vmem:[#allocation7 + $0x78] sm:$0xff]
        %395 = vmatpush.msra.mxu0 %v394
        %396 = vmatpush.msra.mxu0 %v393
        %397 = vmatpush.msra.mxu0 %v392
        %398 = vmatpush.msra.mxu0 %v391
        %399 = vmatpush.msra.mxu0 %v390
        %400 = vmatpush.msra.mxu0 %v389
        %401 = vmatpush.msra.mxu0 %v388
        %402 = vmatpush.msra.mxu0 %v387
        %403 = vmatpush.msra.mxu0 %v386
        %404 = vmatpush.msra.mxu0 %v385
        %405 = vmatpush.msra.mxu0 %v384
        %406 = vmatpush.msra.mxu0 %v383
        %407 = vmatpush.msra.mxu0 %v382
        %408 = vmatpush.msra.mxu0 %v381
        %409 = vmatpush.msra.mxu0 %v380
        %410 = vmatpush.msra.mxu0 %v379
        %411 = vmatmul.f32.gmra.mxu0 %v363
        %v412 = vpop.f32.mrf.mxu0
        %v413 = vadd.f32 0.0, %v412
        %414 = vmatmul.f32.gmra.mxu0 %v364
        %v415 = vpop.f32.mrf.mxu0
        %v416 = vadd.f32 0.0, %v415
        %417 = vmatmul.f32.gmra.mxu0 %v365
        %v418 = vpop.f32.mrf.mxu0
        %v419 = vadd.f32 0.0, %v418
        %420 = vmatmul.f32.gmra.mxu0 %v366
        %v421 = vpop.f32.mrf.mxu0
        %v422 = vadd.f32 0.0, %v421
        %423 = vmatmul.f32.gmra.mxu0 %v367
        %v424 = vpop.f32.mrf.mxu0
        %v425 = vadd.f32 0.0, %v424
        %426 = vmatmul.f32.gmra.mxu0 %v368
        %v427 = vpop.f32.mrf.mxu0
        %v428 = vadd.f32 0.0, %v427
        %429 = vmatmul.f32.gmra.mxu0 %v369
        %v430 = vpop.f32.mrf.mxu0
        %v431 = vadd.f32 0.0, %v430
        %432 = vmatmul.f32.gmra.mxu0 %v370
        %v433 = vpop.f32.mrf.mxu0
        %v434 = vadd.f32 0.0, %v433
        %435 = vmatmul.f32.gmra.mxu0 %v371
        %v436 = vpop.f32.mrf.mxu0
        %v437 = vadd.f32 0.0, %v436
        %438 = vmatmul.f32.gmra.mxu0 %v372
        %v439 = vpop.f32.mrf.mxu0
        %v440 = vadd.f32 0.0, %v439
        %441 = vmatmul.f32.gmra.mxu0 %v373
        %v442 = vpop.f32.mrf.mxu0
        %v443 = vadd.f32 0.0, %v442
        %444 = vmatmul.f32.gmra.mxu0 %v374
        %v445 = vpop.f32.mrf.mxu0
        %v446 = vadd.f32 0.0, %v445
        %447 = vmatmul.f32.gmra.mxu0 %v375
        %v448 = vpop.f32.mrf.mxu0
        %v449 = vadd.f32 0.0, %v448
        %450 = vmatmul.f32.gmra.mxu0 %v376
        %v451 = vpop.f32.mrf.mxu0
        %v452 = vadd.f32 0.0, %v451
        %453 = vmatmul.f32.gmra.mxu0 %v377
        %v454 = vpop.f32.mrf.mxu0
        %v455 = vadd.f32 0.0, %v454
        %456 = vmatmul.f32.gmra.mxu0 %v378
        %v457 = vpop.f32.mrf.mxu0
        %v458 = vadd.f32 0.0, %v457
        %459 = vdwg.mxu0
        %v460 = vld [vmem:[%s3] sm:$0x1]
        %v462 = vperm.slane %v460, 0
        %464 = vmatpush.msra.mxu0 %v458
        %465 = vmatpush.msra.mxu0 %v455
        %466 = vmatpush.msra.mxu0 %v452
        %467 = vmatpush.msra.mxu0 %v449
        %468 = vmatpush.msra.mxu0 %v446
        %469 = vmatpush.msra.mxu0 %v443
        %470 = vmatpush.msra.mxu0 %v440
        %471 = vmatpush.msra.mxu0 %v437
        %472 = vmatpush.msra.mxu0 %v434
        %473 = vmatpush.msra.mxu0 %v431
        %474 = vmatpush.msra.mxu0 %v428
        %475 = vmatpush.msra.mxu0 %v425
        %476 = vmatpush.msra.mxu0 %v422
        %477 = vmatpush.msra.mxu0 %v419
        %478 = vmatpush.msra.mxu0 %v416
        %479 = vmatpush.msra.mxu0 %v413
        %480 = vmatmul.f32.gmra.mxu0 %v347
        %v481 = vpop.f32.mrf.mxu0
        %v482 = vadd.f32 %v462, %v481
        %483 = vmatmul.f32.gmra.mxu0 %v348
        %v484 = vpop.f32.mrf.mxu0
        %v485 = vadd.f32 %v462, %v484
        %486 = vmatmul.f32.gmra.mxu0 %v349
        %v487 = vpop.f32.mrf.mxu0
        %v488 = vadd.f32 %v462, %v487
        %489 = vmatmul.f32.gmra.mxu0 %v350
        %v490 = vpop.f32.mrf.mxu0
        %v491 = vadd.f32 %v462, %v490
        %492 = vmatmul.f32.gmra.mxu0 %v351
        %v493 = vpop.f32.mrf.mxu0
        %v494 = vadd.f32 %v462, %v493
        %495 = vmatmul.f32.gmra.mxu0 %v352
        %v496 = vpop.f32.mrf.mxu0
        %v497 = vadd.f32 %v462, %v496
        %498 = vmatmul.f32.gmra.mxu0 %v353
        %v499 = vpop.f32.mrf.mxu0
        %v500 = vadd.f32 %v462, %v499
        %501 = vmatmul.f32.gmra.mxu0 %v354
        %v502 = vpop.f32.mrf.mxu0
        %v503 = vadd.f32 %v462, %v502
        %504 = vmatmul.f32.gmra.mxu0 %v355
        %v505 = vpop.f32.mrf.mxu0
        %v506 = vadd.f32 %v462, %v505
        %507 = vmatmul.f32.gmra.mxu0 %v356
        %v508 = vpop.f32.mrf.mxu0
        %v509 = vadd.f32 %v462, %v508
        %510 = vmatmul.f32.gmra.mxu0 %v357
        %v511 = vpop.f32.mrf.mxu0
        %v512 = vadd.f32 %v462, %v511
        %513 = vmatmul.f32.gmra.mxu0 %v358
        %v514 = vpop.f32.mrf.mxu0
        %v515 = vadd.f32 %v462, %v514
        %516 = vmatmul.f32.gmra.mxu0 %v359
        %v517 = vpop.f32.mrf.mxu0
        %v518 = vadd.f32 %v462, %v517
        %519 = vmatmul.f32.gmra.mxu0 %v360
        %v520 = vpop.f32.mrf.mxu0
        %v521 = vadd.f32 %v462, %v520
        %522 = vmatmul.f32.gmra.mxu0 %v361
        %v523 = vpop.f32.mrf.mxu0
        %v524 = vadd.f32 %v462, %v523
        %525 = vmatmul.f32.gmra.mxu0 %v362
        %v526 = vpop.f32.mrf.mxu0
        %v527 = vadd.f32 %v462, %v526
        %528 = vdwg.mxu0
        %v529 = vmax.f32 %v482, 0.0
        %v530 = vmax.f32 %v485, 0.0
        %v531 = vmax.f32 %v488, 0.0
        %v532 = vmax.f32 %v491, 0.0
        %v533 = vmax.f32 %v494, 0.0
        %v534 = vmax.f32 %v497, 0.0
        %v535 = vmax.f32 %v500, 0.0
        %v536 = vmax.f32 %v503, 0.0
        %v537 = vmax.f32 %v506, 0.0
        %v538 = vmax.f32 %v509, 0.0
        %v539 = vmax.f32 %v512, 0.0
        %v540 = vmax.f32 %v515, 0.0
        %v541 = vmax.f32 %v518, 0.0
        %v542 = vmax.f32 %v521, 0.0
        %v543 = vmax.f32 %v524, 0.0
        %v544 = vmax.f32 %v527, 0.0
        %v545 = vld [vmem:[#allocation8] sm:$0xff]
        %v546 = vld [vmem:[#allocation8 + $0x8] sm:$0xff]
        %v547 = vld [vmem:[#allocation8 + $0x10] sm:$0xff]
        %v548 = vld [vmem:[#allocation8 + $0x18] sm:$0xff]
        %v549 = vld [vmem:[#allocation8 + $0x20] sm:$0xff]
        %v550 = vld [vmem:[#allocation8 + $0x28] sm:$0xff]
        %v551 = vld [vmem:[#allocation8 + $0x30] sm:$0xff]
        %v552 = vld [vmem:[#allocation8 + $0x38] sm:$0xff]
        %v553 = vld [vmem:[#allocation8 + $0x40] sm:$0xff]
        %v554 = vld [vmem:[#allocation8 + $0x48] sm:$0xff]
        %v555 = vld [vmem:[#allocation8 + $0x50] sm:$0xff]
        %v556 = vld [vmem:[#allocation8 + $0x58] sm:$0xff]
        %v557 = vld [vmem:[#allocation8 + $0x60] sm:$0xff]
        %v558 = vld [vmem:[#allocation8 + $0x68] sm:$0xff]
        %v559 = vld [vmem:[#allocation8 + $0x70] sm:$0xff]
        %v560 = vld [vmem:[#allocation8 + $0x78] sm:$0xff]
        %561 = vmatpush.msra.mxu0 %v560
        %562 = vmatpush.msra.mxu0 %v559
        %563 = vmatpush.msra.mxu0 %v558
        %564 = vmatpush.msra.mxu0 %v557
        %565 = vmatpush.msra.mxu0 %v556
        %566 = vmatpush.msra.mxu0 %v555
        %567 = vmatpush.msra.mxu0 %v554
        %568 = vmatpush.msra.mxu0 %v553
        %569 = vmatpush.msra.mxu0 %v552
        %570 = vmatpush.msra.mxu0 %v551
        %571 = vmatpush.msra.mxu0 %v550
        %572 = vmatpush.msra.mxu0 %v549
        %573 = vmatpush.msra.mxu0 %v548
        %574 = vmatpush.msra.mxu0 %v547
        %575 = vmatpush.msra.mxu0 %v546
        %576 = vmatpush.msra.mxu0 %v545
        %577 = vmatmul.f32.gmra.mxu0 %v529
        %v578 = vpop.f32.mrf.mxu0
        %v579 = vadd.f32 0.0, %v578
        %580 = vmatmul.f32.gmra.mxu0 %v530
        %v581 = vpop.f32.mrf.mxu0
        %v582 = vadd.f32 0.0, %v581
        %583 = vmatmul.f32.gmra.mxu0 %v531
        %v584 = vpop.f32.mrf.mxu0
        %v585 = vadd.f32 0.0, %v584
        %586 = vmatmul.f32.gmra.mxu0 %v532
        %v587 = vpop.f32.mrf.mxu0
        %v588 = vadd.f32 0.0, %v587
        %589 = vmatmul.f32.gmra.mxu0 %v533
        %v590 = vpop.f32.mrf.mxu0
        %v591 = vadd.f32 0.0, %v590
        %592 = vmatmul.f32.gmra.mxu0 %v534
        %v593 = vpop.f32.mrf.mxu0
        %v594 = vadd.f32 0.0, %v593
        %595 = vmatmul.f32.gmra.mxu0 %v535
        %v596 = vpop.f32.mrf.mxu0
        %v597 = vadd.f32 0.0, %v596
        %598 = vmatmul.f32.gmra.mxu0 %v536
        %v599 = vpop.f32.mrf.mxu0
        %v600 = vadd.f32 0.0, %v599
        %601 = vmatmul.f32.gmra.mxu0 %v537
        %v602 = vpop.f32.mrf.mxu0
        %v603 = vadd.f32 0.0, %v602
        %604 = vmatmul.f32.gmra.mxu0 %v538
        %v605 = vpop.f32.mrf.mxu0
        %v606 = vadd.f32 0.0, %v605
        %607 = vmatmul.f32.gmra.mxu0 %v539
        %v608 = vpop.f32.mrf.mxu0
        %v609 = vadd.f32 0.0, %v608
        %610 = vmatmul.f32.gmra.mxu0 %v540
        %v611 = vpop.f32.mrf.mxu0
        %v612 = vadd.f32 0.0, %v611
        %613 = vmatmul.f32.gmra.mxu0 %v541
        %v614 = vpop.f32.mrf.mxu0
        %v615 = vadd.f32 0.0, %v614
        %616 = vmatmul.f32.gmra.mxu0 %v542
        %v617 = vpop.f32.mrf.mxu0
        %v618 = vadd.f32 0.0, %v617
        %619 = vmatmul.f32.gmra.mxu0 %v543
        %v620 = vpop.f32.mrf.mxu0
        %v621 = vadd.f32 0.0, %v620
        %622 = vmatmul.f32.gmra.mxu0 %v544
        %v623 = vpop.f32.mrf.mxu0
        %v624 = vadd.f32 0.0, %v623
        %625 = vdwg.mxu0
        %v626 = vld [vmem:[%s5] sm:$0x1]
        %v628 = vperm.slane %v626, 0
        %630 = vmatpush.msra.mxu0 %v624
        %631 = vmatpush.msra.mxu0 %v621
        %632 = vmatpush.msra.mxu0 %v618
        %633 = vmatpush.msra.mxu0 %v615
        %634 = vmatpush.msra.mxu0 %v612
        %635 = vmatpush.msra.mxu0 %v609
        %636 = vmatpush.msra.mxu0 %v606
        %637 = vmatpush.msra.mxu0 %v603
        %638 = vmatpush.msra.mxu0 %v600
        %639 = vmatpush.msra.mxu0 %v597
        %640 = vmatpush.msra.mxu0 %v594
        %641 = vmatpush.msra.mxu0 %v591
        %642 = vmatpush.msra.mxu0 %v588
        %643 = vmatpush.msra.mxu0 %v585
        %644 = vmatpush.msra.mxu0 %v582
        %645 = vmatpush.msra.mxu0 %v579
        %646 = vmatmul.f32.gmra.mxu0 %v347
        %v647 = vpop.f32.mrf.mxu0
        %v648 = vadd.f32 %v628, %v647
        %649 = vmatmul.f32.gmra.mxu0 %v348
        %v650 = vpop.f32.mrf.mxu0
        %651 = vmatmul.f32.gmra.mxu0 %v349
        %v652 = vpop.f32.mrf.mxu0
        %v653 = vadd.f32 %v628, %v652
        %654 = vmatmul.f32.gmra.mxu0 %v350
        %v655 = vpop.f32.mrf.mxu0
        %656 = vmatmul.f32.gmra.mxu0 %v351
        %v657 = vpop.f32.mrf.mxu0
        %v658 = vadd.f32 %v628, %v657
        %659 = vmatmul.f32.gmra.mxu0 %v352
        %v660 = vpop.f32.mrf.mxu0
        %661 = vmatmul.f32.gmra.mxu0 %v353
        %v662 = vpop.f32.mrf.mxu0
        %v663 = vadd.f32 %v628, %v662
        %664 = vmatmul.f32.gmra.mxu0 %v354
        %v665 = vpop.f32.mrf.mxu0
        %666 = vmatmul.f32.gmra.mxu0 %v355
        %v667 = vpop.f32.mrf.mxu0
        %v668 = vadd.f32 %v628, %v667
        %669 = vmatmul.f32.gmra.mxu0 %v356
        %v670 = vpop.f32.mrf.mxu0
        %671 = vmatmul.f32.gmra.mxu0 %v357
        %v672 = vpop.f32.mrf.mxu0
        %v673 = vadd.f32 %v628, %v672
        %674 = vmatmul.f32.gmra.mxu0 %v358
        %v675 = vpop.f32.mrf.mxu0
        %676 = vmatmul.f32.gmra.mxu0 %v359
        %v677 = vpop.f32.mrf.mxu0
        %v678 = vadd.f32 %v628, %v677
        %679 = vmatmul.f32.gmra.mxu0 %v360
        %v680 = vpop.f32.mrf.mxu0
        %681 = vmatmul.f32.gmra.mxu0 %v361
        %v682 = vpop.f32.mrf.mxu0
        %v683 = vadd.f32 %v628, %v682
        %684 = vmatmul.f32.gmra.mxu0 %v362
        %v685 = vpop.f32.mrf.mxu0
        %686 = vdwg.mxu0
        %v687 = vmax.f32 %v648, 0.0
        %v688 = vmax.f32 %v653, 0.0
        %v689 = vmax.f32 %v658, 0.0
        %v690 = vmax.f32 %v663, 0.0
        %v691 = vmax.f32 %v668, 0.0
        %v692 = vmax.f32 %v673, 0.0
        %v693 = vmax.f32 %v678, 0.0
        %v694 = vmax.f32 %v683, 0.0
        %v696 = vrot.slane %v687, 1
        %v699 = vrot.slane %v689, 7
        %v702 = vrot.slane %v690, 6
        %v705 = vrot.slane %v691, 5
        %v708 = vrot.slane %v692, 4
        %v711 = vrot.slane %v693, 3
        %v714 = vrot.slane %v694, 2
        %vm716 = vcmask 1040384
        %v717 = vsel %vm716, %v696, %v688
        %vm718 = vcmask 1041408
        %v719 = vsel %vm718, %v717, %v699
        %vm720 = vcmask 1042432
        %v721 = vsel %vm720, %v719, %v702
        %vm722 = vcmask 1043456
        %v723 = vsel %vm722, %v721, %v705
        %vm724 = vcmask 1044480
        %v725 = vsel %vm724, %v723, %v708
        %vm726 = vcmask 1045504
        %v727 = vsel %vm726, %v725, %v711
        %vm728 = vcmask 1046528
        %v729 = vsel %vm728, %v727, %v714
        %730 = vst [vmem:[%s346] sm:$0xff] %v729
        %s731 = sand.u32 %s171, 1
        %s732 = scalar_lea.sflag [#allocation4], %s731
        %s733 = sand.u32 %s171, 1
        %s734 = smul.addr %s733, 8
        %s735 = scalar_lea.vmem [#allocation10], %s734
        // Predicated region
        $region61: #{tpu_custom_call.1} parent=43 // pred_check
          %p736 = pneg %p181
        $region62: #{tpu_custom_call.1} parent=43 // pred_check_branch
          %738 = sbr.rel (%p736) target = $region64
        $region63: #{tpu_custom_call.1} parent=43 // pred_region
          %740 = vsyncadd %s732, 0
          %s741 = smul.addr %s27, 8
          %s742 = scalar_lea.hbm %s6, %s741
          %s744 = sshll.u32 %s735, 4
          %s745 = int_to_ptr.vmem [resolvable:$true] %s744
          %s746 = sshll.u32 %s742, 4
          %s747 = int_to_ptr.hbm [resolvable:$true] %s746
          %749 = dma.vmem_to_hbm [thread:$0]  %s745, 128, %s747, %s732
        $region64: #{tpu_custom_call.1} parent=43 // pred_fallthru
          _
      $region44: #{tpu_custom_call.1} parent=5 // pred_fallthru
        _
      %p750 = scmp.le.s32.totalorder 2, %s22
      // Predicated region
      $region65: #{tpu_custom_call.1} parent=5 // pred_check
        %p751 = pneg %p750
      $region66: #{tpu_custom_call.1} parent=5 // pred_check_branch
        %753 = sbr.rel (%p751) target = $region68
      $region67: #{tpu_custom_call.1} parent=5 // pred_region
        %s754 = ssub.s32 %s22, 2
        // Predicated region
        $region69: #{tpu_custom_call.1} parent=67 // pred_check
          %p755 = pneg %p187
        $region70: #{tpu_custom_call.1} parent=67 // pred_check_branch
          %757 = sbr.rel (%p755) target = $region72
        $region71: #{tpu_custom_call.1} parent=67 // pred_region
          %s758 = sand.u32 %s172, 1
          %s759 = scalar_lea.sflag [#allocation4], %s758
          %s760 = sand.u32 %s172, 1
          %s761 = smul.addr %s760, 8
          %s762 = scalar_lea.vmem [#allocation10], %s761
          %764 = dma.done %s759, 128
        $region72: #{tpu_custom_call.1} parent=67 // pred_fallthru
          _
      $region68: #{tpu_custom_call.1} parent=5 // pred_fallthru
        _
    $region6: #{tpu_custom_call.1} parent=1 // loop_footer
      %s26 = sadd.s32 1, %s22
    $region7: #{tpu_custom_call.1} parent=1 // loop_footer_branch
      %21 = sbr.rel target = $region3
    $region8: #{tpu_custom_call.1} parent=1 // loop_exit
      _
    %765 = vsyncpa [#allocation3], 1
    %s766 = scalar_lea.sflag [#allocation3], 1
    %767 = vsyncpa %s766, 1
    %768 = vsyncpa [#allocation6], 1
    %s769 = scalar_lea.sflag [#allocation6], 1
    %770 = vsyncpa %s769, 1
    %771 = vsyncpa [#allocation9], 1
    %772 = vsyncpa [#allocation4], 1
    %s773 = scalar_lea.sflag [#allocation4], 1
    %774 = vsyncpa %s773, 1

</llo_original>
